<compile_context>
chip_gen: v6e
topology: v6e:2x2x1
jax: 0.10.0
libtpu: 0.0.40
codegen_flags: <defaults>
</compile_context>

<pallas_src>
import functools
import math

import jax
import jax.numpy as jnp
from jax import lax
from jax.experimental import pallas as pl
from jax.experimental.pallas import tpu as pltpu


# ---------------------------------------------------------------------------
# Tiling / VMEM helpers
# ---------------------------------------------------------------------------
_LINEAR_BUDGET = 24 * 1024 * 1024   # target double-buffered working set (v7x-safe)
_ATTN_BUDGET = 24 * 1024 * 1024


def _sublane(dtype) -> int:
    """Sublane multiple for a dtype (8 for f32, 16 for bf16, 32 for int8)."""
    return max(8, 32 // jnp.dtype(dtype).itemsize)


def _pick_tile(dim: int, pref: int, align: int) -> int:
    """Largest tile <= pref that divides `dim` and is a multiple of `align`,
    falling back to the full dim (a full-extent block is always legal).
    TODO(synk): pad awkward (prime-ish) dims instead of the full-dim fallback."""
    if dim <= pref:
        return dim
    t = (pref // align) * align
    while t >= align:
        if dim % t == 0:
            return t
        t -= align
    return dim


def _vmem_limit(footprint_bytes: int) -> int:
    """Scoped VMEM limit derived from the tile footprint.
    Floor = 32 MiB default; cap = 64 MiB so a v6e-sized request never exceeds
    the v7x per-TC physical VMEM."""
    return int(min(64 * 1024 * 1024, max(32 * 1024 * 1024, 2 * footprint_bytes)))


def _linear_tiles(rows: int, d_out: int, d_in: int, dtype):
    """Pick (tm, tn, tk) for a tiled matmul, shrinking 512-wide preferences
    until the double-buffered working set fits the budget."""
    sub = _sublane(dtype)
    item = jnp.dtype(dtype).itemsize
    tm_p, tn_p, tk_p = 512, 512, 512
    while True:
        tm = _pick_tile(rows, tm_p, sub)
        tn = _pick_tile(d_out, tn_p, 128)
        tk = _pick_tile(d_in, tk_p, 128)
        # double-buffered inputs/bias + double-buffered output + f32 accumulator
        fp = (2 * (tm * tk + tk * tn + tn) + 2 * tm * tn) * item + tm * tn * 4
        if fp <= _LINEAR_BUDGET:
            return tm, tn, tk, fp
        if tk_p > 128:
            tk_p //= 2
        elif tm_p > 128:
            tm_p //= 2
        elif tn_p > 128:
            tn_p //= 2
        else:
            return tm, tn, tk, fp


# ---------------------------------------------------------------------------
# Shared tiled linear kernel body: y = x @ W + b  (k axis = reduction axis)
# ---------------------------------------------------------------------------
def _linear_kernel(x_ref, w_ref, b_ref, o_ref, acc_ref, *, k_axis):
    @pl.when(pl.program_id(k_axis) == 0)
    def _():
        acc_ref[...] = jnp.zeros_like(acc_ref)

    acc_ref[...] += jnp.dot(x_ref[...], w_ref[...],
                            preferred_element_type=jnp.float32)

    @pl.when(pl.program_id(k_axis) == pl.num_programs(k_axis) - 1)
    def _():
        o_ref[...] = (acc_ref[...] + b_ref[...]).astype(o_ref.dtype)


# ---------------------------------------------------------------------------
# Projection with the [S,B,D] -> [B,S,d_out] layout change folded into specs.
# Requires d_in % 128 == 0 (per-batch lane-column slicing of the [S, B*d_in]
# view); callers fall back to pallas_linear + explicit transpose otherwise.
# ---------------------------------------------------------------------------
def project_in(x_sbd, w, b):
    S, B, d_in = x_sbd.shape
    d_out = w.shape[1]
    dtype = x_sbd.dtype
    tm, tn, tk, fp = _linear_tiles(S, d_out, d_in, dtype)
    kb = d_in // tk
    x2 = x_sbd.reshape(S, B * d_in)          # free reshape (contiguous)
    b2 = b.reshape(1, d_out)
    grid = (S // tm, B, d_out // tn, d_in // tk)
    item = jnp.dtype(dtype).itemsize
    cost = pl.CostEstimate(
        flops=int(2 * S * B * d_in * d_out),
        transcendentals=0,
        bytes_accessed=int((S * B * (d_in + d_out)
                            + (S // tm) * B * (d_in * d_out + d_out)) * item))
    return pl.pallas_call(
        functools.partial(_linear_kernel, k_axis=3),
        out_shape=jax.ShapeDtypeStruct((B, S, d_out), dtype),
        grid=grid,
        in_specs=[
            # per-batch lane-column slice of the seq-major activation
            pl.BlockSpec((tm, tk), lambda si, b_, j, k, kb=kb: (si, b_ * kb + k)),
            pl.BlockSpec((tk, tn), lambda si, b_, j, k: (k, j)),
            pl.BlockSpec((1, tn), lambda si, b_, j, k: (0, j)),
        ],
        out_specs=pl.BlockSpec((None, tm, tn), lambda si, b_, j, k: (b_, si, j)),
        scratch_shapes=[pltpu.VMEM((tm, tn), jnp.float32)],
        compiler_params=pltpu.CompilerParams(
            dimension_semantics=("parallel", "parallel", "parallel", "arbitrary"),
            vmem_limit_bytes=_vmem_limit(fp)),
        cost_estimate=cost,
    )(x2, w, b2)


# ---------------------------------------------------------------------------
# Output projection: [B,S,d_in] -> [S,B,d_out], transpose folded into out_spec.
# Requires d_out % 128 == 0.
# ---------------------------------------------------------------------------
def project_out(x_bsd, w, b):
    B, S, d_in = x_bsd.shape
    d_out = w.shape[1]
    dtype = x_bsd.dtype
    tm, tn, tk, fp = _linear_tiles(S, d_out, d_in, dtype)
    nb = d_out // tn
    b2 = b.reshape(1, d_out)
    grid = (S // tm, B, d_out // tn, d_in // tk)
    item = jnp.dtype(dtype).itemsize
    cost = pl.CostEstimate(
        flops=int(2 * S * B * d_in * d_out),
        transcendentals=0,
        bytes_accessed=int((S * B * (d_in + d_out)
                            + (S // tm) * B * (d_in * d_out + d_out)) * item))
    out2 = pl.pallas_call(
        functools.partial(_linear_kernel, k_axis=3),
        out_shape=jax.ShapeDtypeStruct((S, B * d_out), dtype),
        grid=grid,
        in_specs=[
            pl.BlockSpec((None, tm, tk), lambda si, b_, j, k: (b_, si, k)),
            pl.BlockSpec((tk, tn), lambda si, b_, j, k: (k, j)),
            pl.BlockSpec((1, tn), lambda si, b_, j, k: (0, j)),
        ],
        out_specs=pl.BlockSpec((tm, tn),
                               lambda si, b_, j, k, nb=nb: (si, b_ * nb + j)),
        scratch_shapes=[pltpu.VMEM((tm, tn), jnp.float32)],
        compiler_params=pltpu.CompilerParams(
            dimension_semantics=("parallel", "parallel", "parallel", "arbitrary"),
            vmem_limit_bytes=_vmem_limit(fp)),
        cost_estimate=cost,
    )(x_bsd, w, b2)
    return out2.reshape(S, B, d_out)


# ---------------------------------------------------------------------------
# Generic row-major linear (fallback path when d_model % 128 != 0)
# ---------------------------------------------------------------------------
def pallas_linear(x, w, b):
    n, d_in = x.shape
    d_out = w.shape[1]
    dtype = x.dtype
    tm, tn, tk, fp = _linear_tiles(n, d_out, d_in, dtype)
    b2 = b.reshape(1, d_out)
    grid = (n // tm, d_out // tn, d_in // tk)
    item = jnp.dtype(dtype).itemsize
    cost = pl.CostEstimate(
        flops=int(2 * n * d_in * d_out), transcendentals=0,
        bytes_accessed=int((n * (d_in + d_out)
                            + (n // tm) * (d_in * d_out + d_out)) * item))
    return pl.pallas_call(
        functools.partial(_linear_kernel, k_axis=2),
        out_shape=jax.ShapeDtypeStruct((n, d_out), dtype),
        grid=grid,
        in_specs=[pl.BlockSpec((tm, tk), lambda i, j, k: (i, k)),
                  pl.BlockSpec((tk, tn), lambda i, j, k: (k, j)),
                  pl.BlockSpec((1, tn), lambda i, j, k: (0, j))],
        out_specs=pl.BlockSpec((tm, tn), lambda i, j, k: (i, j)),
        scratch_shapes=[pltpu.VMEM((tm, tn), jnp.float32)],
        compiler_params=pltpu.CompilerParams(
            dimension_semantics=("parallel", "parallel", "arbitrary"),
            vmem_limit_bytes=_vmem_limit(fp)),
        cost_estimate=cost,
    )(x, w, b2)


# ---------------------------------------------------------------------------
# Flash-style attention kernel.
#   grid = (B, q_tiles, kv_tiles); kv axis is the (arbitrary) reduction axis.
#   Each step handles ALL heads of one (batch, q-block); the f32 accumulator is
#   one lane-dense [tq, H*d_k] slab updated with a single full-width FMA.
# ---------------------------------------------------------------------------
def _mha_kernel(q_ref, k_ref, v_ref, o_ref, m_sc, l_sc, acc_sc, *,
                heads, d_k, scale, mxu_dtype):
    ki = pl.program_id(2)

    @pl.when(ki == 0)
    def _():
        m_sc[...] = jnp.full_like(m_sc, -jnp.inf)
        l_sc[...] = jnp.zeros_like(l_sc)
        acc_sc[...] = jnp.zeros_like(acc_sc)

    # Softmax scale folded into q once per grid step (hoisted out of the head
    # loop); operands cast once for the MXU (bf16 on v6e/v7x when requested).
    q = (q_ref[...] * scale).astype(mxu_dtype)      # [tq,  H*d_k]
    k = k_ref[...].astype(mxu_dtype)                # [tkv, H*d_k]
    v = v_ref[...].astype(mxu_dtype)                # [tkv, H*d_k]
    tq = acc_sc.shape[0]

    alpha_cols, pv_parts = [], []
    for h in range(heads):                          # static unroll; heads is small
        sl = slice(h * d_k, (h + 1) * d_k)
        # q . k^T contracting the last dims -- no materialized transpose.
        s = lax.dot_general(q[:, sl], k[:, sl], (((1,), (1,)), ((), ())),
                            preferred_element_type=jnp.float32)        # [tq, tkv]
        m_prev = m_sc[h]                                               # [tq, 1]
        m_new = jnp.maximum(m_prev, jnp.max(s, axis=-1, keepdims=True))
        alpha = jnp.exp(m_prev - m_new)                                # [tq, 1]
        p = jnp.exp(s - m_new)                                         # f32 softmax math
        # TODO(synk): on v6e/v7x a bf16 exp (bf16 EUP path) roughly doubles exp
        #             throughput; kept f32 here for cross-generation numerics.
        l_sc[h] = alpha * l_sc[h] + jnp.sum(p, axis=-1, keepdims=True)
        m_sc[h] = m_new
        pv_parts.append(jnp.dot(p.astype(mxu_dtype), v[:, sl],
                                preferred_element_type=jnp.float32))   # [tq, d_k]
        alpha_cols.append(alpha)

    # One lane-dense [tq, H*d_k] FMA on the f32 accumulator (no per-head masked
    # stores at d_k/128 lane utilization).
    alpha_slab = jnp.concatenate(
        [jnp.broadcast_to(a, (tq, d_k)) for a in alpha_cols], axis=-1)
    pv_slab = jnp.concatenate(pv_parts, axis=-1)
    acc_sc[...] = alpha_slab * acc_sc[...] + pv_slab

    # TODO(synk): training-mode dropout on the attention probabilities.
    # TODO(synk): optional attention mask (mask=None semantics only).

    @pl.when(ki == pl.num_programs(2) - 1)
    def _():
        inv_cols = [pl.reciprocal(l_sc[h], approx=True) for h in range(heads)]
        inv_slab = jnp.concatenate(
            [jnp.broadcast_to(c, (tq, d_k)) for c in inv_cols], axis=-1)
        o_ref[...] = (acc_sc[...] * inv_slab).astype(o_ref.dtype)   # full-width vst


def pallas_attention(q_arr, k_arr, v_arr, *, heads, d_model, scale, cols,
                     mxu_dtype=None):
    """Batched MHA over [B, S, *] operands.

    q_arr/k_arr/v_arr may all be the same fused [B, S, 3*d_model] buffer
    (`cols` selects which d_model-wide column block holds Q/K/V), or three
    separate [B, S, d_model] buffers (cols == (0, 0, 0)).
    `mxu_dtype` (default: input dtype) sets the matmul operand dtype; pass
    jnp.bfloat16 on v6e/v7x to engage the bf16 MXU with f32 softmax math.
    Returns [B, Sq, d_model]."""
    B, Sq, _ = q_arr.shape
    Skv = k_arr.shape[1]
    d_k = d_model // heads
    dtype = q_arr.dtype
    if mxu_dtype is None:
        mxu_dtype = dtype
    sub = _sublane(dtype)
    item = jnp.dtype(dtype).itemsize

    # Large q tiles cut K/V HBM re-reads (K/V are re-fetched once per q tile);
    # a full-Skv kv tile streams K/V exactly once per (b, q-tile).
    tq_pref, tkv_pref = 512, 1024
    if B == 1 and Sq >= 2 * sub:
        # Keep >= 2 parallel grid slices so both v7x TensorCores get work.
        tq_pref = min(tq_pref, ((Sq // 2) // sub) * sub)
    while True:
        tq = _pick_tile(Sq, tq_pref, sub)
        tkv = _pick_tile(Skv, tkv_pref, sub)
        fp = ((2 * tq + 4 * tkv) * d_model * item     # double-buffered q/k/v tiles
              + 2 * tq * d_model * item               # double-buffered output tile
              + tq * d_model * 4                      # f32 accumulator
              + 2 * tq * 128 * 4                      # m/l scratch (lane padded)
              + 2 * tq * tkv * 4)                     # live score/prob working set
        if fp <= _ATTN_BUDGET:
            break
        if tkv_pref > 64:
            tkv_pref //= 2
        elif tq_pref > 64:
            tq_pref //= 2
        else:
            break
    grid = (B, Sq // tq, Skv // tkv)

    qc, kc, vc = cols
    q_spec = pl.BlockSpec((None, tq, d_model), lambda b, qi, ki, c=qc: (b, qi, c))
    k_spec = pl.BlockSpec((None, tkv, d_model), lambda b, qi, ki, c=kc: (b, ki, c))
    v_spec = pl.BlockSpec((None, tkv, d_model), lambda b, qi, ki, c=vc: (b, ki, c))
    out_spec = pl.BlockSpec((None, tq, d_model), lambda b, qi, ki: (b, qi, 0))
    # TODO(synk): sweep pipeline_mode=pl.Buffered(3) on k/v specs for small d_k.

    n_q_tiles = Sq // tq
    cost = pl.CostEstimate(
        flops=int(4 * B * heads * Sq * Skv * d_k),
        transcendentals=int(B * heads * Sq * Skv),
        bytes_accessed=int((2 * B * Sq * d_model
                            + 2 * n_q_tiles * B * Skv * d_model) * item))

    kernel = functools.partial(_mha_kernel, heads=heads, d_k=d_k, scale=scale,
                               mxu_dtype=mxu_dtype)
    return pl.pallas_call(
        kernel,
        out_shape=jax.ShapeDtypeStruct((B, Sq, d_model), dtype),
        grid=grid,
        in_specs=[q_spec, k_spec, v_spec],
        out_specs=out_spec,
        scratch_shapes=[
            pltpu.VMEM((heads, tq, 1), jnp.float32),     # running max
            pltpu.VMEM((heads, tq, 1), jnp.float32),     # running denominator
            pltpu.VMEM((tq, d_model), jnp.float32),      # lane-dense output acc
        ],
        compiler_params=pltpu.CompilerParams(
            dimension_semantics=("parallel", "parallel", "arbitrary"),
            vmem_limit_bytes=_vmem_limit(fp)),
        cost_estimate=cost,
    )(q_arr, k_arr, v_arr)


# ---------------------------------------------------------------------------
# Parameter prep + full MultiHeadAttention forward (mask=None, eval dropout)
# ---------------------------------------------------------------------------
def prepare_params(params):
    """One-time prep: pre-concatenate the fused QKV weight/bias so the forward
    pass never pays a per-call 3*D^2 HBM concat."""
    p = dict(params)
    p["wqkv"] = jnp.concatenate([params["wq"], params["wk"], params["wv"]], axis=1)
    p["bqkv"] = jnp.concatenate([params["bq"], params["bk"], params["bv"]])
    return p


def multi_head_attention(query, key, value, params, heads, *, attn_mxu_dtype=None):
    """query/key/value: [S, B, D] (PyTorch layout). Returns [S, B, D]."""
    Sq, B, D = query.shape
    Skv = key.shape[0]
    assert D % heads == 0
    d_k = D // heads
    scale = 1.0 / math.sqrt(d_k)
    layout_fold_ok = (D % 128 == 0)

    self_attn = (query is key) and (key is value)
    if self_attn and layout_fold_ok:
        # Fused QKV projection: one pipelined matmul, activation read once,
        # [S,B,D]->[B,S,3D] layout change folded into the projection specs.
        wqkv = params.get("wqkv")
        bqkv = params.get("bqkv")
        if wqkv is None:       # prefer prepare_params(); avoid per-call concat
            wqkv = jnp.concatenate([params["wq"], params["wk"], params["wv"]], axis=1)
            bqkv = jnp.concatenate([params["bq"], params["bk"], params["bv"]])
        qkv = project_in(query, wqkv, bqkv)              # [B, Sq, 3D]
        q_arr = k_arr = v_arr = qkv                      # column-selected buffer
        cols = (0, 1, 2)
    elif layout_fold_ok:
        q_arr = project_in(query, params["wq"], params["bq"])   # [B, Sq, D]
        k_arr = project_in(key, params["wk"], params["bk"])     # [B, Skv, D]
        v_arr = project_in(value, params["wv"], params["bv"])   # [B, Skv, D]
        cols = (0, 0, 0)
    else:
        # Generic fallback (d_model not a multiple of 128): explicit transposes.
        xq = jnp.transpose(query, (1, 0, 2)).reshape(B * Sq, D)
        xk = jnp.transpose(key, (1, 0, 2)).reshape(B * Skv, D)
        xv = jnp.transpose(value, (1, 0, 2)).reshape(B * Skv, D)
        q_arr = pallas_linear(xq, params["wq"], params["bq"]).reshape(B, Sq, D)
        k_arr = pallas_linear(xk, params["wk"], params["bk"]).reshape(B, Skv, D)
        v_arr = pallas_linear(xv, params["wv"], params["bv"]).reshape(B, Skv, D)
        cols = (0, 0, 0)

    ctx = pallas_attention(q_arr, k_arr, v_arr, heads=heads, d_model=D,
                           scale=scale, cols=cols,
                           mxu_dtype=attn_mxu_dtype)             # [B, Sq, D]

    if layout_fold_ok:
        return project_out(ctx, params["wo"], params["bo"])      # [Sq, B, D]
    out = pallas_linear(ctx.reshape(B * Sq, D), params["wo"], params["bo"])
    return jnp.transpose(out.reshape(B, Sq, D), (1, 0, 2))


# ---------------------------------------------------------------------------
# Pure-JAX reference (mirrors the PyTorch forward) for verification
# ---------------------------------------------------------------------------
def reference_mha(query, key, value, params, heads):
    Sq, B, D = query.shape
    Skv = key.shape[0]
    d_k = D // heads
    scale = 1.0 / math.sqrt(d_k)

    q = (query.reshape(Sq * B, D) @ params["wq"] + params["bq"]).reshape(Sq, B, heads, d_k)
    k = (key.reshape(Skv * B, D) @ params["wk"] + params["bk"]).reshape(Skv, B, heads, d_k)
    v = (value.reshape(Skv * B, D) @ params["wv"] + params["bv"]).reshape(Skv, B, heads, d_k)

    scores = jnp.einsum("ibhd,jbhd->ijbh", q, k) * scale
    attn = jax.nn.softmax(scores, axis=1)             # softmax over keys (dim=1)
    x = jnp.einsum("ijbh,jbhd->ibhd", attn, v).reshape(Sq, B, D)
    return (x.reshape(Sq * B, D) @ params["wo"] + params["bo"]).reshape(Sq, B, D)


# ---------------------------------------------------------------------------
if __name__ == "__main__":
    SEQ, BATCH, D_MODEL, HEADS = 16, 2, 128, 4

    root = jax.random.PRNGKey(0)
    keys = jax.random.split(root, 12)
    std = 1.0 / math.sqrt(D_MODEL)

    # Weights stored as [d_in, d_out] (PyTorch nn.Linear weight transposed).
    params = {
        "wq": jax.random.normal(keys[0], (D_MODEL, D_MODEL), jnp.float32) * std,
        "bq": jax.random.normal(keys[1], (D_MODEL,), jnp.float32) * std,
        "wk": jax.random.normal(keys[2], (D_MODEL, D_MODEL), jnp.float32) * std,
        "bk": jax.random.normal(keys[3], (D_MODEL,), jnp.float32) * std,
        "wv": jax.random.normal(keys[4], (D_MODEL, D_MODEL), jnp.float32) * std,
        "bv": jax.random.normal(keys[5], (D_MODEL,), jnp.float32) * std,
        "wo": jax.random.normal(keys[6], (D_MODEL, D_MODEL), jnp.float32) * std,
        "bo": jax.random.normal(keys[7], (D_MODEL,), jnp.float32) * std,
    }
    params = prepare_params(params)     # one-time fused QKV weight/bias concat

    x = jax.random.normal(keys[8], (SEQ, BATCH, D_MODEL), jnp.float32)
    key_t = jax.random.normal(keys[9], (SEQ, BATCH, D_MODEL), jnp.float32)
    value_t = jax.random.normal(keys[10], (SEQ, BATCH, D_MODEL), jnp.float32)

    # Tolerances: 5e-3 for f32 paths (EUP approximate reciprocal in the softmax
    # normalization); looser bounds for the bf16-MXU / bf16 end-to-end paths.

    # 1) Self-attention (fused QKV projection, layout-folded projections).
    out_self = jax.block_until_ready(multi_head_attention(x, x, x, params, HEADS))
    ref_self = reference_mha(x, x, x, params, HEADS)
    assert out_self.shape == (SEQ, BATCH, D_MODEL)
    assert jnp.allclose(out_self, ref_self, atol=5e-3, rtol=5e-3), \
        "self-attention mismatch vs reference"

    # 2) Cross-attention (separate projections).
    out_cross = jax.block_until_ready(
        multi_head_attention(x, key_t, value_t, params, HEADS))
    ref_cross = reference_mha(x, key_t, value_t, params, HEADS)
    assert jnp.allclose(out_cross, ref_cross, atol=5e-3, rtol=5e-3), \
        "cross-attention mismatch vs reference"

    # 3) bf16-MXU attention on f32 inputs (recommended v6e/v7x setting:
    #    bf16 matmul operands, f32 softmax/accumulation).
    out_bf16mxu = jax.block_until_ready(
        multi_head_attention(x, x, x, params, HEADS, attn_mxu_dtype=jnp.bfloat16))
    diff = float(jnp.max(jnp.abs(out_bf16mxu - ref_self)))
    assert math.isfinite(diff) and diff < 0.1, \
        "bf16-MXU attention diverged from f32 reference"

    # 4) bf16 end-to-end operands.
    params_bf = {kk: vv.astype(jnp.bfloat16) for kk, vv in params.items()}
    x_bf = x.astype(jnp.bfloat16)
    out_bf = jax.block_until_ready(
        multi_head_attention(x_bf, x_bf, x_bf, params_bf, HEADS))
    assert out_bf.dtype == jnp.bfloat16
    diff = float(jnp.max(jnp.abs(out_bf.astype(jnp.float32) - ref_self)))
    assert math.isfinite(diff) and diff < 0.25, \
        "bf16 path diverged from f32 reference"

    print("KERNEL_OK")
</pallas_src>

<mosaic_0001>
module attributes {stable_mosaic.version = 11 : i64} {
  func.func @_linear_kernel(%arg0: i32, %arg1: i32, %arg2: i32, %arg3: i32, %arg4: memref<16x128xf32, #tpu.memory_space<vmem>>, %arg5: memref<128x384xf32, #tpu.memory_space<vmem>>, %arg6: memref<1x384xf32, #tpu.memory_space<vmem>>, %arg7: memref<1x16x384xf32, #tpu.memory_space<vmem>>, %arg8: memref<16x384xf32, #tpu.memory_space<vmem>>) attributes {dimension_semantics = [#tpu.dimension_semantics<parallel>, #tpu.dimension_semantics<parallel>, #tpu.dimension_semantics<parallel>, #tpu.dimension_semantics<arbitrary>], iteration_bounds = array<i64: 1, 2, 1, 1>, scalar_prefetch = 0 : i64, scratch_operands = 1 : i64, tpu.core_type = #tpu.core_type<tc>, window_params = [{transform_indices = @transform_0, window_bounds = array<i64: 16, 128>}, {transform_indices = @transform_1, window_bounds = array<i64: 128, 384>}, {transform_indices = @transform_2, window_bounds = array<i64: 1, 384>}, {transform_indices = @transform_3, window_bounds = array<i64: 1, 16, 384>}]} {
    %c0_i32 = arith.constant 0 : i32
    %0 = arith.cmpi eq, %arg3, %c0_i32 : i32
    %1 = arith.extui %0 : i1 to i32
    %c0_i32_0 = arith.constant 0 : i32
    %2 = arith.cmpi ne, %1, %c0_i32_0 : i32
    scf.if %2 {
      %cst_10 = arith.constant 0.000000e+00 : f32
      %12 = vector.broadcast %cst_10 : f32 to vector<16x384xf32>
      %c0_11 = arith.constant 0 : index
      %c0_12 = arith.constant 0 : index
      %13 = vector.load %arg8[%c0_11, %c0_12] : memref<16x384xf32, #tpu.memory_space<vmem>>, vector<16x384xf32>
      tpu.vector_store %arg8[%c0_11, %c0_12], %12 {strides = array<i32>} : memref<16x384xf32, #tpu.memory_space<vmem>>, vector<16x384xf32>,
    } else {
    }
    %c0 = arith.constant 0 : index
    %c0_1 = arith.constant 0 : index
    %3 = vector.load %arg8[%c0, %c0_1] : memref<16x384xf32, #tpu.memory_space<vmem>>, vector<16x384xf32>
    %c0_2 = arith.constant 0 : index
    %c0_3 = arith.constant 0 : index
    %4 = vector.load %arg4[%c0_2, %c0_3] : memref<16x128xf32, #tpu.memory_space<vmem>>, vector<16x128xf32>
    %c0_4 = arith.constant 0 : index
    %c0_5 = arith.constant 0 : index
    %5 = vector.load %arg5[%c0_4, %c0_5] : memref<128x384xf32, #tpu.memory_space<vmem>>, vector<128x384xf32>
    %cst = arith.constant dense<0.000000e+00> : vector<16x384xf32>
    %6 = tpu.matmul %4, %5, %cst {dimension_numbers = #tpu.dot_dimension_numbers<[1], [0], [0], [1], [0, 0, 1, 1], [], []>} : vector<16x128xf32>, vector<128x384xf32>, vector<16x384xf32> -> vector<16x384xf32>
    %7 = arith.addf %3, %6 : vector<16x384xf32>
    %c0_6 = arith.constant 0 : index
    %c0_7 = arith.constant 0 : index
    %8 = vector.load %arg8[%c0_6, %c0_7] : memref<16x384xf32, #tpu.memory_space<vmem>>, vector<16x384xf32>
    tpu.vector_store %arg8[%c0_6, %c0_7], %7 {strides = array<i32>} : memref<16x384xf32, #tpu.memory_space<vmem>>, vector<16x384xf32>,
    %c0_i32_8 = arith.constant 0 : i32
    %9 = arith.cmpi eq, %arg3, %c0_i32_8 : i32
    %10 = arith.extui %9 : i1 to i32
    %c0_i32_9 = arith.constant 0 : i32
    %11 = arith.cmpi ne, %10, %c0_i32_9 : i32
    scf.if %11 {
      %c0_10 = arith.constant 0 : index
      %c0_11 = arith.constant 0 : index
      %12 = vector.load %arg8[%c0_10, %c0_11] : memref<16x384xf32, #tpu.memory_space<vmem>>, vector<16x384xf32>
      %c0_12 = arith.constant 0 : index
      %c0_13 = arith.constant 0 : index
      %13 = vector.load %arg6[%c0_12, %c0_13] : memref<1x384xf32, #tpu.memory_space<vmem>>, vector<1x384xf32>
      %14 = vector.broadcast %13 : vector<1x384xf32> to vector<16x384xf32>
      %15 = arith.addf %12, %14 : vector<16x384xf32>
      %c0_14 = arith.constant 0 : index
      %c0_15 = arith.constant 0 : index
      %c0_16 = arith.constant 0 : index
      %16 = vector.load %arg7[%c0_14, %c0_15, %c0_16] : memref<1x16x384xf32, #tpu.memory_space<vmem>>, vector<1x16x384xf32>
      %17 = vector.shape_cast %16 : vector<1x16x384xf32> to vector<16x384xf32>
      %18 = vector.shape_cast %15 : vector<16x384xf32> to vector<1x16x384xf32>
      tpu.vector_store %arg7[%c0_14, %c0_15, %c0_16], %18 {strides = array<i32>} : memref<1x16x384xf32, #tpu.memory_space<vmem>>, vector<1x16x384xf32>,
    } else {
    }
    return
  }
  func.func @transform_0(%arg0: i32, %arg1: i32, %arg2: i32, %arg3: i32) -> (i32, i32) {
    %c1_i32 = arith.constant 1 : i32
    %0 = arith.muli %arg1, %c1_i32 : i32
    %1 = arith.addi %0, %arg3 : i32
    %c0_i32 = arith.constant 0 : i32
    return %arg0, %1 : i32, i32
  }
  func.func @transform_1(%arg0: i32, %arg1: i32, %arg2: i32, %arg3: i32) -> (i32, i32) {
    %c0_i32 = arith.constant 0 : i32
    return %arg3, %arg2 : i32, i32
  }
  func.func @transform_2(%arg0: i32, %arg1: i32, %arg2: i32, %arg3: i32) -> (i32, i32) {
    %c0_i32 = arith.constant 0 : i32
    %c0_i32_0 = arith.constant 0 : i32
    return %c0_i32, %arg2 : i32, i32
  }
  func.func @transform_3(%arg0: i32, %arg1: i32, %arg2: i32, %arg3: i32) -> (i32, i32, i32) {
    %c0_i32 = arith.constant 0 : i32
    return %arg1, %arg0, %arg2 : i32, i32, i32
  }
}

</mosaic_0001>

<llo_original>
// kernel: tpu_custom_call.1
$region0: #{tpu_custom_call.1}
  #allocation0 [shape = 'u32[]', space=smem, size = 0x4, offset = 0x4, fixed_abs, tag = 'smem constant byte address 0x4 - core index']
  #allocation1 [shape = 'u32[144,128]{1,0:T(1,128)}', space=vmem, size = 0x12000, scoped, tag = 'internal scratch']
  #allocation2 [shape = 'f32[16,384]{1,0:T(8,128)}', space=vmem, size = 0x6000, scoped, tag = 'scratch operand']
  %s0 = inlined_call_operand.hbm [shape: f32[16,256], index: 0, kind: input, shape index: {}]
  %s1 = inlined_call_operand.hbm [shape: f32[128,384], index: 1, kind: input, shape index: {}]
  %s2 = inlined_call_operand.vmem [shape: f32[1,384], index: 2, kind: input, shape index: {}]
  %s3 = inlined_call_operand.hbm [shape: f32[2,16,384], index: 3, kind: output, shape index: {}]
  %s4 = sld [smem:[#allocation0]]
  $region61: #{tpu_custom_call.1} parent=0
    _
  %s6 = ssub.s32 1, %s4
  %s7 = scalar_select 0, %s6, %s4
  $region1: #{tpu_custom_call.1} parent=0
    #allocation3 [shape = 'u8[16384]{0}', space=vmem, size = 0x4000, scoped, tag = 'input window, operand 0']
    #allocation4 [shape = 's32[2]{0}', space=sflag, size = 0x8, scoped, tag = 'scoped memory for tpu_custom_call.1']
    #allocation5 [shape = 's32[2]{0}', space=sflag, size = 0x8, scoped, tag = 'scoped memory for tpu_custom_call.1']
    #allocation6 [shape = 'u8[196608]{0}', space=vmem, size = 0x30000, scoped, tag = 'input window, operand 1, single buffered']
    #allocation7 [shape = 's32[1]{0}', space=sflag, size = 0x4, scoped, tag = 'scoped memory for tpu_custom_call.1']
    #allocation8 [shape = 'u8[49152]{0}', space=vmem, size = 0xc000, scoped, tag = 'output window, operand 0']
    %8 = vsyncpa [#allocation4], 0
    %s9 = scalar_lea.sflag [#allocation4], 1
    %10 = vsyncpa %s9, 0
    %11 = vsyncpa [#allocation7], 0
    %12 = vsyncpa [#allocation5], 0
    %s13 = scalar_lea.sflag [#allocation5], 1
    %14 = vsyncpa %s13, 0
    loop: start=0, step=1, limit=4
    $region2: #{tpu_custom_call.1} parent=1 // loop_pre_header
      _
    $region3: #{tpu_custom_call.1} parent=1 // loop_header
      %s16 = sphi 0, %s20
      %p17 = scmp.ge.s32.totalorder %s16, 4
      %s23 = sphi 0, %s49
      %s24 = sphi 0, %s45
      %s25 = sphi 0, %s41
      %s26 = sphi 0, %s37
      %s27 = sphi 0, %s23
      %s28 = sphi 0, %s24
      %s29 = sphi 0, %s25
      %s30 = sphi 0, %s26
      %s31 = sphi 0, %s27
      %s32 = sphi 0, %s28
      %s33 = sphi 0, %s29
      %s34 = sphi 0, %s30
      %s56 = sphi 0, %s58
      %s59 = sphi 0, %s56
      %s60 = sphi 0, %s59
      %s76 = sphi 0, %s60
      %s84 = sphi 0, %s86
      %s87 = sphi 0, %s84
      %s88 = sphi 0, %s87
      %s104 = sphi 0, %s88
      %s110 = sphi 0, %s112
      %s113 = sphi 0, %s110
      %s114 = sphi 0, %s113
      %s130 = sphi 0, %s114
      %s140 = sphi 0, %s142
      %s143 = sphi 0, %s140
      %s144 = sphi 0, %s143
      %s160 = sphi 0, %s144
    $region4: #{tpu_custom_call.1} parent=1 // loop_header_branch
      %19 = sbr.rel (%p17) target = $region8
    $region5: #{tpu_custom_call.1} parent=1 // loop_body
      %s21 = ssub.s32 %s16, 1
      %s22 = ssub.s32 %s16, 2
      %s35 = sadd.s32 1, %s26
      %p36 = scmp.ge.s32.totalorder %s35, 1
      %s37 = scalar_select %p36, 0, %s35
      %s38 = sadd.s32 1, %s25
      %s39 = scalar_select %p36, %s38, %s25
      %p40 = scmp.ge.s32.totalorder %s39, 1
      %s41 = scalar_select %p40, 0, %s39
      %s42 = sadd.s32 1, %s24
      %s43 = scalar_select %p40, %s42, %s24
      %p44 = scmp.ge.s32.totalorder %s43, 2
      %s45 = scalar_select %p44, 0, %s43
      %s46 = sadd.s32 1, %s23
      %s47 = scalar_select %p44, %s46, %s23
      %p48 = scmp.ge.s32.totalorder %s47, 1
      %s49 = scalar_select %p48, 0, %s47
      %s50 = sadd.s32 %s24, %s26
      %s51 = sadd.s32 %s45, %s37
      %s52 = ssub.s32 %s23, %s49
      %s53 = ssub.s32 %s50, %s51
      %s54 = sor.u32 %s52, %s53
      %p55 = scmp.eq.s32.totalorder %s54, 0
      %s57 = sadd.s32 %s56, 1
      %s58 = scalar_select %p55, %s56, %s57
      %p61 = pneg %p55
      %p62 = scmp.eq.s32.totalorder %s16, 1
      %p63 = por %p61, %p62
      %p64 = scmp.ne.s32.totalorder %s56, %s59
      %p65 = scmp.eq.s32.totalorder %s16, 0
      %p66 = por %p64, %p65
      %p67 = scmp.ne.s32.totalorder %s56, %s59
      %p68 = scmp.eq.s32.totalorder %s21, 1
      %p69 = por %p67, %p68
      %p70 = scmp.ne.s32.totalorder %s59, %s60
      %p71 = scmp.eq.s32.totalorder %s21, 0
      %p72 = por %p70, %p71
      %p73 = scmp.ne.s32.totalorder %s59, %s60
      %p74 = scmp.eq.s32.totalorder %s22, 1
      %p75 = por %p73, %p74
      %p77 = scmp.ne.s32.totalorder %s60, %s76
      %p78 = scmp.eq.s32.totalorder %s22, 0
      %p79 = por %p77, %p78
      %s80 = ssub.s32 %s26, %s37
      %s81 = ssub.s32 %s25, %s41
      %s82 = sor.u32 %s80, %s81
      %p83 = scmp.eq.s32.totalorder %s82, 0
      %s85 = sadd.s32 %s84, 1
      %s86 = scalar_select %p83, %s84, %s85
      %p89 = pneg %p83
      %p90 = scmp.eq.s32.totalorder %s16, 1
      %p91 = por %p89, %p90
      %p92 = scmp.ne.s32.totalorder %s84, %s87
      %p93 = scmp.eq.s32.totalorder %s16, 0
      %p94 = por %p92, %p93
      %p95 = scmp.ne.s32.totalorder %s84, %s87
      %p96 = scmp.eq.s32.totalorder %s21, 1
      %p97 = por %p95, %p96
      %p98 = scmp.ne.s32.totalorder %s87, %s88
      %p99 = scmp.eq.s32.totalorder %s21, 0
      %p100 = por %p98, %p99
      %p101 = scmp.ne.s32.totalorder %s87, %s88
      %p102 = scmp.eq.s32.totalorder %s22, 1
      %p103 = por %p101, %p102
      %p105 = scmp.ne.s32.totalorder %s88, %s104
      %p106 = scmp.eq.s32.totalorder %s22, 0
      %p107 = por %p105, %p106
      %s108 = ssub.s32 %s25, %s41
      %p109 = scmp.eq.s32.totalorder %s108, 0
      %s111 = sadd.s32 %s110, 1
      %s112 = scalar_select %p109, %s110, %s111
      %p115 = pneg %p109
      %p116 = scmp.eq.s32.totalorder %s16, 1
      %p117 = por %p115, %p116
      %p118 = scmp.ne.s32.totalorder %s110, %s113
      %p119 = scmp.eq.s32.totalorder %s16, 0
      %p120 = por %p118, %p119
      %p121 = scmp.ne.s32.totalorder %s110, %s113
      %p122 = scmp.eq.s32.totalorder %s21, 1
      %p123 = por %p121, %p122
      %p124 = scmp.ne.s32.totalorder %s113, %s114
      %p125 = scmp.eq.s32.totalorder %s21, 0
      %p126 = por %p124, %p125
      %p127 = scmp.ne.s32.totalorder %s113, %s114
      %p128 = scmp.eq.s32.totalorder %s22, 1
      %p129 = por %p127, %p128
      %p131 = scmp.ne.s32.totalorder %s114, %s130
      %p132 = scmp.eq.s32.totalorder %s22, 0
      %p133 = por %p131, %p132
      %s134 = ssub.s32 %s24, %s45
      %s135 = ssub.s32 %s23, %s49
      %s136 = sor.u32 %s134, %s135
      %s137 = ssub.s32 %s25, %s41
      %s138 = sor.u32 %s136, %s137
      %p139 = scmp.eq.s32.totalorder %s138, 0
      %s141 = sadd.s32 %s140, 1
      %s142 = scalar_select %p139, %s140, %s141
      %p145 = pneg %p139
      %p146 = scmp.eq.s32.totalorder %s16, 1
      %p147 = por %p145, %p146
      %p148 = scmp.ne.s32.totalorder %s140, %s143
      %p149 = scmp.eq.s32.totalorder %s16, 0
      %p150 = por %p148, %p149
      %p151 = scmp.ne.s32.totalorder %s140, %s143
      %p152 = scmp.eq.s32.totalorder %s21, 1
      %p153 = por %p151, %p152
      %p154 = scmp.ne.s32.totalorder %s143, %s144
      %p155 = scmp.eq.s32.totalorder %s21, 0
      %p156 = por %p154, %p155
      %p157 = scmp.ne.s32.totalorder %s143, %s144
      %p158 = scmp.eq.s32.totalorder %s22, 1
      %p159 = por %p157, %p158
      %p161 = scmp.ne.s32.totalorder %s144, %s160
      %p162 = scmp.eq.s32.totalorder %s22, 0
      %p163 = por %p161, %p162
      %p164 = scmp.le.s32.totalorder 1, %s16
      %p165 = scmp.lt.s32.totalorder %s16, 3
      %p166 = pnand %p164, %p165
      %p167 = pneg %p166
      // Predicated region
      $region9: #{tpu_custom_call.1} parent=5 // pred_check
        _
      $region10: #{tpu_custom_call.1} parent=5 // pred_check_branch
        %169 = sbr.rel (%p166) target = $region12
      $region11: #{tpu_custom_call.1} parent=5 // pred_region
        %s170 = ssub.s32 %s16, 1
        // Predicated region
        $region13: #{tpu_custom_call.1} parent=11 // pred_check
          %p171 = pneg %p100
        $region14: #{tpu_custom_call.1} parent=11 // pred_check_branch
          %173 = sbr.rel (%p171) target = $region16
        $region15: #{tpu_custom_call.1} parent=11 // pred_region
          %s174 = smul.u32 16, %s30
          %s175 = smul.u32 3, %s29
          %s177 = ssub.s32 6144, 6144
          %178 = vsyncadd [#allocation7], %s177
          %s179 = smul.addr %s174, 3
          %s180 = sadd.s32 %s175, %s179
          %s181 = smul.addr %s180, 128
          %s182 = scalar_lea.hbm %s1, %s181
          %s183 = sshll.u32 [#allocation6], 4
          %s184 = int_to_ptr.vmem [resolvable:$true] %s183
          %189 = dma.hbm_to_vmem [thread:$0]  %s182, 6144, %s184, [#allocation7], 384, 384, 24
        $region16: #{tpu_custom_call.1} parent=11 // pred_fallthru
          _
        // Predicated region
        $region17: #{tpu_custom_call.1} parent=11 // pred_check
          %p190 = pneg %p126
        $region18: #{tpu_custom_call.1} parent=11 // pred_check_branch
          %192 = sbr.rel (%p190) target = $region20
        $region19: #{tpu_custom_call.1} parent=11 // pred_region
          %s193 = smul.u32 3, %s29
          %p194 = scmp.lt.s32.totalorder %s193, 2
          %s195 = scalar_select %p194, %s193, 2
          %s196 = scalar_lea.vmem %s2, %s195
          %s197 = smul.u32 3, %s29
        $region20: #{tpu_custom_call.1} parent=11 // pred_fallthru
          _
      $region12: #{tpu_custom_call.1} parent=5 // pred_fallthru
        _
      %p198 = scmp.lt.s32.totalorder %s16, 2
      // Predicated region
      $region21: #{tpu_custom_call.1} parent=5 // pred_check
        %p199 = pneg %p198
      $region22: #{tpu_custom_call.1} parent=5 // pred_check_branch
        %201 = sbr.rel (%p199) target = $region24
      $region23: #{tpu_custom_call.1} parent=5 // pred_region
        // Predicated region
        $region25: #{tpu_custom_call.1} parent=23 // pred_check
          %p202 = pneg %p66
        $region26: #{tpu_custom_call.1} parent=23 // pred_check_branch
          %204 = sbr.rel (%p202) target = $region28
        $region27: #{tpu_custom_call.1} parent=23 // pred_region
          %s205 = sand.u32 %s56, 1
          %s206 = scalar_lea.sflag [#allocation4], %s205
          %s207 = sand.u32 %s56, 1
          %s208 = smul.addr %s207, 16
          %s209 = scalar_lea.vmem [#allocation3], %s208
          %s210 = sadd.s32 %s24, %s26
          %s211 = smul.u32 2, %s23
          %s213 = ssub.s32 256, 256
          %214 = vsyncadd %s206, %s213
          %s215 = smul.addr %s211, 2
          %s216 = sadd.s32 %s210, %s215
          %s217 = smul.addr %s216, 128
          %s218 = scalar_lea.hbm %s0, %s217
          %s219 = sshll.u32 %s209, 4
          %s220 = int_to_ptr.vmem [resolvable:$true] %s219
          %225 = dma.hbm_to_vmem [thread:$0]  %s218, 256, %s220, %s206, 256, 128, 8
        $region28: #{tpu_custom_call.1} parent=23 // pred_fallthru
          _
      $region24: #{tpu_custom_call.1} parent=5 // pred_fallthru
        _
      %p226 = scmp.le.s32.totalorder 1, %s16
      %p227 = scmp.lt.s32.totalorder %s16, 3
      %p228 = pnand %p226, %p227
      %p229 = pneg %p228
      // Predicated region
      $region29: #{tpu_custom_call.1} parent=5 // pred_check
        _
      $region30: #{tpu_custom_call.1} parent=5 // pred_check_branch
        %231 = sbr.rel (%p228) target = $region32
      $region31: #{tpu_custom_call.1} parent=5 // pred_region
        %s232 = ssub.s32 %s16, 1
        %s233 = sand.u32 %s59, 1
        %s234 = scalar_lea.sflag [#allocation4], %s233
        %s235 = sand.u32 %s59, 1
        %s236 = smul.addr %s235, 16
        %s237 = scalar_lea.vmem [#allocation3], %s236
        // Predicated region
        $region33: #{tpu_custom_call.1} parent=31 // pred_check
          %p238 = pneg %p72
        $region34: #{tpu_custom_call.1} parent=31 // pred_check_branch
          %240 = sbr.rel (%p238) target = $region36
        $region35: #{tpu_custom_call.1} parent=31 // pred_region
          %241 = dma.done %s234, 256
        $region36: #{tpu_custom_call.1} parent=31 // pred_fallthru
          _
        // Predicated region
        $region37: #{tpu_custom_call.1} parent=31 // pred_check
          %p242 = pneg %p100
        $region38: #{tpu_custom_call.1} parent=31 // pred_check_branch
          %244 = sbr.rel (%p242) target = $region40
        $region39: #{tpu_custom_call.1} parent=31 // pred_region
          %245 = dma.done [#allocation7], 6144
        $region40: #{tpu_custom_call.1} parent=31 // pred_fallthru
          _
        %s246 = sand.u32 %s59, 1
        %s247 = scalar_lea.sflag [#allocation4], %s246
        %s248 = sand.u32 %s59, 1
        %s249 = smul.addr %s248, 16
        %s250 = scalar_lea.vmem [#allocation3], %s249
        %p251 = pneg %p72
        %p252 = pneg %p69
        %p253 = pneg %p100
        %p254 = pneg %p97
        %s255 = smul.u32 3, %s29
        %p256 = scmp.lt.s32.totalorder %s255, 2
        %s257 = scalar_select %p256, %s255, 2
        %s258 = scalar_lea.vmem %s2, %s257
        %p259 = pneg %p126
        %p260 = pneg %p123
        %p261 = pneg %p156
        %p262 = pneg %p153
        %s263 = sand.u32 %s143, 1
        %s264 = scalar_lea.sflag [#allocation5], %s263
        %s265 = sand.u32 %s143, 1
        %s266 = smul.addr %s265, 48
        %s267 = scalar_lea.vmem [#allocation8], %s266
        %s268 = sadd.s32 %s28, %s30
        %s269 = smul.u32 2, %s27
        %s270 = smul.u32 16, %s30
        %s271 = smul.u32 3, %s29
        %s272 = smul.u32 3, %s29
        %p273 = scmp.lt.s32.totalorder %s272, 2
        %s274 = scalar_select %p273, %s272, 2
        %s275 = scalar_lea.vmem %s2, %s274
        %s276 = smul.u32 3, %s29
        %s277 = smul.u32 2, %s27
        %s278 = smul.u32 3, %s29
        %p279 = scmp.eq.s32.totalorder %s30, 0
        // Predicated region
        $region41: #{tpu_custom_call.1} parent=31 // pred_check
          %p280 = pneg %p279
        $region42: #{tpu_custom_call.1} parent=31 // pred_check_branch
          %282 = sbr.rel (%p280) target = $region44
        $region43: #{tpu_custom_call.1} parent=31 // pred_region
          %283 = vst [vmem:[#allocation2] sm:$0xff] 0.0
          %284 = vst [vmem:[#allocation2 + $0x8] sm:$0xff] 0.0
          %285 = vst [vmem:[#allocation2 + $0x10] sm:$0xff] 0.0
          %286 = vst [vmem:[#allocation2 + $0x18] sm:$0xff] 0.0
          %287 = vst [vmem:[#allocation2 + $0x20] sm:$0xff] 0.0
          %288 = vst [vmem:[#allocation2 + $0x28] sm:$0xff] 0.0
        $region44: #{tpu_custom_call.1} parent=31 // pred_fallthru
          _
        %v289 = vld [vmem:[#allocation2] sm:$0xff]
        %v290 = vld [vmem:[#allocation2 + $0x8] sm:$0xff]
        %v291 = vld [vmem:[#allocation2 + $0x10] sm:$0xff]
        %v292 = vld [vmem:[#allocation2 + $0x18] sm:$0xff]
        %v293 = vld [vmem:[#allocation2 + $0x20] sm:$0xff]
        %v294 = vld [vmem:[#allocation2 + $0x28] sm:$0xff]
        %v295 = vld [vmem:[%s237] sm:$0xff]
        %v296 = vld [vmem:[%s237 + $0x8] sm:$0xff]
        %v297 = vld [vmem:[#allocation6] sm:$0xff]
        %v298 = vld [vmem:[#allocation6 + $0x8] sm:$0xff]
        %v299 = vld [vmem:[#allocation6 + $0x10] sm:$0xff]
        %v300 = vld [vmem:[#allocation6 + $0x18] sm:$0xff]
        %v301 = vld [vmem:[#allocation6 + $0x20] sm:$0xff]
        %v302 = vld [vmem:[#allocation6 + $0x28] sm:$0xff]
        %v303 = vld [vmem:[#allocation6 + $0x30] sm:$0xff]
        %v304 = vld [vmem:[#allocation6 + $0x38] sm:$0xff]
        %v305 = vld [vmem:[#allocation6 + $0x40] sm:$0xff]
        %v306 = vld [vmem:[#allocation6 + $0x48] sm:$0xff]
        %v307 = vld [vmem:[#allocation6 + $0x50] sm:$0xff]
        %v308 = vld [vmem:[#allocation6 + $0x58] sm:$0xff]
        %v309 = vld [vmem:[#allocation6 + $0x60] sm:$0xff]
        %v310 = vld [vmem:[#allocation6 + $0x68] sm:$0xff]
        %v311 = vld [vmem:[#allocation6 + $0x70] sm:$0xff]
        %v312 = vld [vmem:[#allocation6 + $0x78] sm:$0xff]
        %v313 = vld [vmem:[#allocation6 + $0x80] sm:$0xff]
        %v314 = vld [vmem:[#allocation6 + $0x88] sm:$0xff]
        %v315 = vld [vmem:[#allocation6 + $0x90] sm:$0xff]
        %v316 = vld [vmem:[#allocation6 + $0x98] sm:$0xff]
        %v317 = vld [vmem:[#allocation6 + $0xa0] sm:$0xff]
        %v318 = vld [vmem:[#allocation6 + $0xa8] sm:$0xff]
        %v319 = vld [vmem:[#allocation6 + $0xb0] sm:$0xff]
        %v320 = vld [vmem:[#allocation6 + $0xb8] sm:$0xff]
        %v321 = vld [vmem:[#allocation6 + $0xc0] sm:$0xff]
        %v322 = vld [vmem:[#allocation6 + $0xc8] sm:$0xff]
        %v323 = vld [vmem:[#allocation6 + $0xd0] sm:$0xff]
        %v324 = vld [vmem:[#allocation6 + $0xd8] sm:$0xff]
        %v325 = vld [vmem:[#allocation6 + $0xe0] sm:$0xff]
        %v326 = vld [vmem:[#allocation6 + $0xe8] sm:$0xff]
        %v327 = vld [vmem:[#allocation6 + $0xf0] sm:$0xff]
        %v328 = vld [vmem:[#allocation6 + $0xf8] sm:$0xff]
        %v329 = vld [vmem:[#allocation6 + $0x100] sm:$0xff]
        %v330 = vld [vmem:[#allocation6 + $0x108] sm:$0xff]
        %v331 = vld [vmem:[#allocation6 + $0x110] sm:$0xff]
        %v332 = vld [vmem:[#allocation6 + $0x118] sm:$0xff]
        %v333 = vld [vmem:[#allocation6 + $0x120] sm:$0xff]
        %v334 = vld [vmem:[#allocation6 + $0x128] sm:$0xff]
        %v335 = vld [vmem:[#allocation6 + $0x130] sm:$0xff]
        %v336 = vld [vmem:[#allocation6 + $0x138] sm:$0xff]
        %v337 = vld [vmem:[#allocation6 + $0x140] sm:$0xff]
        %v338 = vld [vmem:[#allocation6 + $0x148] sm:$0xff]
        %v339 = vld [vmem:[#allocation6 + $0x150] sm:$0xff]
        %v340 = vld [vmem:[#allocation6 + $0x158] sm:$0xff]
        %v341 = vld [vmem:[#allocation6 + $0x160] sm:$0xff]
        %v342 = vld [vmem:[#allocation6 + $0x168] sm:$0xff]
        %v343 = vld [vmem:[#allocation6 + $0x170] sm:$0xff]
        %v344 = vld [vmem:[#allocation6 + $0x178] sm:$0xff]
        %345 = vmatprep.subr.mxu0 %v343
        %346 = vmatpush1.msra.mxu0 %v342
        %347 = vmatprep.subr.mxu0 %v340
        %348 = vmatpush1.msra.mxu0 %v339
        %349 = vmatprep.subr.mxu0 %v337
        %350 = vmatpush1.msra.mxu0 %v336
        %351 = vmatprep.subr.mxu0 %v334
        %352 = vmatpush1.msra.mxu0 %v333
        %353 = vmatprep.subr.mxu0 %v331
        %354 = vmatpush1.msra.mxu0 %v330
        %355 = vmatprep.subr.mxu0 %v328
        %356 = vmatpush1.msra.mxu0 %v327
        %357 = vmatprep.subr.mxu0 %v325
        %358 = vmatpush1.msra.mxu0 %v324
        %359 = vmatprep.subr.mxu0 %v322
        %360 = vmatpush1.msra.mxu0 %v321
        %361 = vmatprep.subr.mxu0 %v319
        %362 = vmatpush1.msra.mxu0 %v318
        %363 = vmatprep.subr.mxu0 %v316
        %364 = vmatpush1.msra.mxu0 %v315
        %365 = vmatprep.subr.mxu0 %v313
        %366 = vmatpush1.msra.mxu0 %v312
        %367 = vmatprep.subr.mxu0 %v310
        %368 = vmatpush1.msra.mxu0 %v309
        %369 = vmatprep.subr.mxu0 %v307
        %370 = vmatpush1.msra.mxu0 %v306
        %371 = vmatprep.subr.mxu0 %v304
        %372 = vmatpush1.msra.mxu0 %v303
        %373 = vmatprep.subr.mxu0 %v301
        %374 = vmatpush1.msra.mxu0 %v300
        %375 = vmatprep.subr.mxu0 %v298
        %376 = vmatpush1.msra.mxu0 %v297
        %377 = vmatprep.subr.mxu0 0.0
        %378 = vmatpush2.msra.mxu0 0.0
        %379 = vmatprep.subr.mxu0 0.0
        %380 = vmatpush2.msra.mxu0 0.0
        %381 = vmatprep.subr.mxu0 0.0
        %382 = vmatpush2.msra.mxu0 0.0
        %383 = vmatprep.subr.mxu0 0.0
        %384 = vmatpush2.msra.mxu0 0.0
        %385 = vmatprep.subr.mxu0 0.0
        %386 = vmatpush2.msra.mxu0 0.0
        %387 = vmatprep.subr.mxu0 0.0
        %388 = vmatpush2.msra.mxu0 0.0
        %389 = vmatprep.subr.mxu0 0.0
        %390 = vmatpush2.msra.mxu0 0.0
        %391 = vmatprep.subr.mxu0 0.0
        %392 = vmatpush2.msra.mxu0 0.0
        %393 = vmatprep.subr.mxu0 0.0
        %394 = vmatpush2.msra.mxu0 0.0
        %395 = vmatprep.subr.mxu0 0.0
        %396 = vmatpush2.msra.mxu0 0.0
        %397 = vmatprep.subr.mxu0 0.0
        %398 = vmatpush2.msra.mxu0 0.0
        %399 = vmatprep.subr.mxu0 0.0
        %400 = vmatpush2.msra.mxu0 0.0
        %401 = vmatprep.subr.mxu0 0.0
        %402 = vmatpush2.msra.mxu0 0.0
        %403 = vmatprep.subr.mxu0 0.0
        %404 = vmatpush2.msra.mxu0 0.0
        %405 = vmatprep.subr.mxu0 0.0
        %406 = vmatpush2.msra.mxu0 0.0
        %407 = vmatprep.subr.mxu0 0.0
        %408 = vmatpush2.msra.mxu0 0.0
        %409 = vmatprep.mubr.f32.mxu0 0.0
        %410 = vmatmul.mubr.f32.gmra.mxu0 %v295
        %v411 = vpop.f32.mrf.mxu0
        %v412 = vadd.f32 0.0, %v411
        %v413 = vpop.f32.mrf.mxu0
        %v414 = vadd.f32 0.0, %v413
        %415 = vmatprep.mubr.f32.mxu0 0.0
        %416 = vmatmul.mubr.f32.gmra.mxu0 %v296
        %v417 = vpop.f32.mrf.mxu0
        %v418 = vadd.f32 0.0, %v417
        %v419 = vpop.f32.mrf.mxu0
        %v420 = vadd.f32 0.0, %v419
        %421 = vdwg.mxu0
        %422 = vmatprep.subr.mxu0 0.0
        %423 = vmatpush1.msra.mxu0 %v344
        %424 = vmatprep.subr.mxu0 0.0
        %425 = vmatpush1.msra.mxu0 %v341
        %426 = vmatprep.subr.mxu0 0.0
        %427 = vmatpush1.msra.mxu0 %v338
        %428 = vmatprep.subr.mxu0 0.0
        %429 = vmatpush1.msra.mxu0 %v335
        %430 = vmatprep.subr.mxu0 0.0
        %431 = vmatpush1.msra.mxu0 %v332
        %432 = vmatprep.subr.mxu0 0.0
        %433 = vmatpush1.msra.mxu0 %v329
        %434 = vmatprep.subr.mxu0 0.0
        %435 = vmatpush1.msra.mxu0 %v326
        %436 = vmatprep.subr.mxu0 0.0
        %437 = vmatpush1.msra.mxu0 %v323
        %438 = vmatprep.subr.mxu0 0.0
        %439 = vmatpush1.msra.mxu0 %v320
        %440 = vmatprep.subr.mxu0 0.0
        %441 = vmatpush1.msra.mxu0 %v317
        %442 = vmatprep.subr.mxu0 0.0
        %443 = vmatpush1.msra.mxu0 %v314
        %444 = vmatprep.subr.mxu0 0.0
        %445 = vmatpush1.msra.mxu0 %v311
        %446 = vmatprep.subr.mxu0 0.0
        %447 = vmatpush1.msra.mxu0 %v308
        %448 = vmatprep.subr.mxu0 0.0
        %449 = vmatpush1.msra.mxu0 %v305
        %450 = vmatprep.subr.mxu0 0.0
        %451 = vmatpush1.msra.mxu0 %v302
        %452 = vmatprep.subr.mxu0 0.0
        %453 = vmatpush1.msra.mxu0 %v299
        %454 = vmatprep.subr.mxu0 0.0
        %455 = vmatpush2.msra.mxu0 0.0
        %456 = vmatprep.subr.mxu0 0.0
        %457 = vmatpush2.msra.mxu0 0.0
        %458 = vmatprep.subr.mxu0 0.0
        %459 = vmatpush2.msra.mxu0 0.0
        %460 = vmatprep.subr.mxu0 0.0
        %461 = vmatpush2.msra.mxu0 0.0
        %462 = vmatprep.subr.mxu0 0.0
        %463 = vmatpush2.msra.mxu0 0.0
        %464 = vmatprep.subr.mxu0 0.0
        %465 = vmatpush2.msra.mxu0 0.0
        %466 = vmatprep.subr.mxu0 0.0
        %467 = vmatpush2.msra.mxu0 0.0
        %468 = vmatprep.subr.mxu0 0.0
        %469 = vmatpush2.msra.mxu0 0.0
        %470 = vmatprep.subr.mxu0 0.0
        %471 = vmatpush2.msra.mxu0 0.0
        %472 = vmatprep.subr.mxu0 0.0
        %473 = vmatpush2.msra.mxu0 0.0
        %474 = vmatprep.subr.mxu0 0.0
        %475 = vmatpush2.msra.mxu0 0.0
        %476 = vmatprep.subr.mxu0 0.0
        %477 = vmatpush2.msra.mxu0 0.0
        %478 = vmatprep.subr.mxu0 0.0
        %479 = vmatpush2.msra.mxu0 0.0
        %480 = vmatprep.subr.mxu0 0.0
        %481 = vmatpush2.msra.mxu0 0.0
        %482 = vmatprep.subr.mxu0 0.0
        %483 = vmatpush2.msra.mxu0 0.0
        %484 = vmatprep.subr.mxu0 0.0
        %485 = vmatpush2.msra.mxu0 0.0
        %486 = vmatprep.mubr.f32.mxu0 0.0
        %487 = vmatmul.mubr.f32.gmra.mxu0 %v295
        %v488 = vpop.f32.mrf.mxu0
        %v489 = vadd.f32 0.0, %v488
        %v490 = vpop.f32.mrf.mxu0
        %491 = vmatprep.mubr.f32.mxu0 0.0
        %492 = vmatmul.mubr.f32.gmra.mxu0 %v296
        %v493 = vpop.f32.mrf.mxu0
        %v494 = vadd.f32 0.0, %v493
        %v495 = vpop.f32.mrf.mxu0
        %496 = vdwg.mxu0
        %v497 = vadd.f32 %v289, %v412
        %v498 = vadd.f32 %v290, %v414
        %v499 = vadd.f32 %v291, %v489
        %v500 = vadd.f32 %v292, %v418
        %v501 = vadd.f32 %v293, %v420
        %v502 = vadd.f32 %v294, %v494
        %503 = vst [vmem:[#allocation2] sm:$0xff] %v497
        %504 = vst [vmem:[#allocation2 + $0x8] sm:$0xff] %v498
        %505 = vst [vmem:[#allocation2 + $0x10] sm:$0xff] %v499
        %506 = vst [vmem:[#allocation2 + $0x18] sm:$0xff] %v500
        %507 = vst [vmem:[#allocation2 + $0x20] sm:$0xff] %v501
        %508 = vst [vmem:[#allocation2 + $0x28] sm:$0xff] %v502
        // Predicated region
        $region45: #{tpu_custom_call.1} parent=31 // pred_check
          %p509 = pneg %p279
        $region46: #{tpu_custom_call.1} parent=31 // pred_check_branch
          %511 = sbr.rel (%p509) target = $region48
        $region47: #{tpu_custom_call.1} parent=31 // pred_region
          %v512 = vld [vmem:[#allocation2] sm:$0xff]
          %v513 = vld [vmem:[#allocation2 + $0x8] sm:$0xff]
          %v514 = vld [vmem:[#allocation2 + $0x10] sm:$0xff]
          %v515 = vld [vmem:[#allocation2 + $0x18] sm:$0xff]
          %v516 = vld [vmem:[#allocation2 + $0x20] sm:$0xff]
          %v517 = vld [vmem:[#allocation2 + $0x28] sm:$0xff]
          %v518 = vld [vmem:[%s275] sm:$0x7]
          %v520 = vlaneseq
          %v521 = vshrl.u32 %v520, 7
          %v522 = vsub.s32 0, %v521
          %v523 = vrot.slane %v518, %v522
          %v524 = vlaneseq
          %v525 = vshrl.u32 %v524, 7
          %v526 = vsub.s32 1, %v525
          %v527 = vrot.slane %v518, %v526
          %v528 = vlaneseq
          %v529 = vshrl.u32 %v528, 7
          %v530 = vsub.s32 2, %v529
          %v531 = vrot.slane %v518, %v530
          %v535 = vadd.f32 %v512, %v523
          %v536 = vadd.f32 %v513, %v527
          %v537 = vadd.f32 %v514, %v531
          %v538 = vadd.f32 %v515, %v523
          %v539 = vadd.f32 %v516, %v527
          %v540 = vadd.f32 %v517, %v531
          %541 = vst [vmem:[%s267] sm:$0xff] %v535
          %542 = vst [vmem:[%s267 + $0x8] sm:$0xff] %v536
          %543 = vst [vmem:[%s267 + $0x10] sm:$0xff] %v537
          %544 = vst [vmem:[%s267 + $0x18] sm:$0xff] %v538
          %545 = vst [vmem:[%s267 + $0x20] sm:$0xff] %v539
          %546 = vst [vmem:[%s267 + $0x28] sm:$0xff] %v540
        $region48: #{tpu_custom_call.1} parent=31 // pred_fallthru
          _
        %s547 = sand.u32 %s143, 1
        %s548 = scalar_lea.sflag [#allocation5], %s547
        %s549 = sand.u32 %s143, 1
        %s550 = smul.addr %s549, 48
        %s551 = scalar_lea.vmem [#allocation8], %s550
        // Predicated region
        $region49: #{tpu_custom_call.1} parent=31 // pred_check
          %p552 = pneg %p153
        $region50: #{tpu_custom_call.1} parent=31 // pred_check_branch
          %554 = sbr.rel (%p552) target = $region52
        $region51: #{tpu_custom_call.1} parent=31 // pred_region
          %s555 = smul.u32 2, %s27
          %s556 = smul.u32 3, %s29
          %s558 = ssub.s32 768, 768
          %559 = vsyncadd %s548, %s558
          %s560 = smul.addr %s555, 3
          %s561 = sadd.s32 %s556, %s560
          %s562 = smul.addr %s28, 6
          %s563 = sadd.s32 %s561, %s562
          %s564 = smul.addr %s563, 128
          %s565 = scalar_lea.hbm %s3, %s564
          %s566 = sshll.u32 %s551, 4
          %s567 = int_to_ptr.vmem [resolvable:$true] %s566
          %572 = dma.vmem_to_hbm [thread:$0]  %s567, 768, %s565, %s548, 384, 384, 24
        $region52: #{tpu_custom_call.1} parent=31 // pred_fallthru
          _
      $region32: #{tpu_custom_call.1} parent=5 // pred_fallthru
        _
      %p573 = scmp.le.s32.totalorder 2, %s16
      // Predicated region
      $region53: #{tpu_custom_call.1} parent=5 // pred_check
        %p574 = pneg %p573
      $region54: #{tpu_custom_call.1} parent=5 // pred_check_branch
        %576 = sbr.rel (%p574) target = $region56
      $region55: #{tpu_custom_call.1} parent=5 // pred_region
        %s577 = ssub.s32 %s16, 2
        // Predicated region
        $region57: #{tpu_custom_call.1} parent=55 // pred_check
          %p578 = pneg %p159
        $region58: #{tpu_custom_call.1} parent=55 // pred_check_branch
          %580 = sbr.rel (%p578) target = $region60
        $region59: #{tpu_custom_call.1} parent=55 // pred_region
          %s581 = sand.u32 %s144, 1
          %s582 = scalar_lea.sflag [#allocation5], %s581
          %s583 = sand.u32 %s144, 1
          %s584 = smul.addr %s583, 48
          %s585 = scalar_lea.vmem [#allocation8], %s584
          %586 = dma.done %s582, 768
        $region60: #{tpu_custom_call.1} parent=55 // pred_fallthru
          _
      $region56: #{tpu_custom_call.1} parent=5 // pred_fallthru
        _
    $region6: #{tpu_custom_call.1} parent=1 // loop_footer
      %s20 = sadd.s32 1, %s16
    $region7: #{tpu_custom_call.1} parent=1 // loop_footer_branch
      %15 = sbr.rel target = $region3
    $region8: #{tpu_custom_call.1} parent=1 // loop_exit
      _
    %587 = vsyncpa [#allocation4], 1
    %s588 = scalar_lea.sflag [#allocation4], 1
    %589 = vsyncpa %s588, 1
    %590 = vsyncpa [#allocation7], 1
    %591 = vsyncpa [#allocation5], 1
    %s592 = scalar_lea.sflag [#allocation5], 1
    %593 = vsyncpa %s592, 1

</llo_original>
